<compile_context>
chip_gen: v6e
topology: v6e:2x2x1
jax: 0.10.0
libtpu: 0.0.40
codegen_flags: <defaults>
</compile_context>

<pallas_src>
import functools

import jax
import jax.numpy as jnp
from jax.experimental import pallas as pl
from jax.experimental.pallas import tpu as pltpu


def _round_up(x, m):
    return ((x + m - 1) // m) * m


# ---------------------------------------------------------------------------
# Pallas kernel: fused LM-head matmul + streaming cross-entropy
# ---------------------------------------------------------------------------
def _ce_lm_head_kernel(h_ref, w_ref, labels_ref, out_ref,
                       m_sc, l_sc, lbl_sc, *, vocab, v_tile, mask_last):
    # h_ref:      (Rt, D)   bf16   hidden rows of this row tile
    # w_ref:      (D, Vt)   bf16   LM-head weight slab of this vocab tile
    # labels_ref: (Rt, 1)   int32  target token ids of this row tile
    # out_ref:    (Rt, 128) f32    per-row loss, broadcast across lanes
    # m_sc/l_sc/lbl_sc: (Rt, 1) f32 running max / running sum-exp / label logit
    v_idx = pl.program_id(1)
    n_v = pl.num_programs(1)

    @pl.when(v_idx == 0)
    def _init():
        m_sc[...] = jnp.full_like(m_sc, -jnp.inf)
        l_sc[...] = jnp.zeros_like(l_sc)
        lbl_sc[...] = jnp.zeros_like(lbl_sc)

    # bf16 x bf16 -> f32 accumulation on the MXU.
    logits = jnp.dot(h_ref[...], w_ref[...],
                     preferred_element_type=jnp.float32)        # (Rt, Vt) f32

    # Global vocab column ids for this tile (needed for the label compare).
    col = jax.lax.broadcasted_iota(jnp.int32, logits.shape, 1) + v_idx * v_tile

    if mask_last:
        # Padding columns exist only in the final vocab tile: mask them there
        # only (lax.cond; pl.when cannot return a value).  Saves 2 full-tile
        # VPU ops on every other grid step (matters in the small-D /
        # VALU-bound regime and on v5e).
        logits = jax.lax.cond(
            v_idx == n_v - 1,
            lambda lg: jnp.where(col < vocab, lg, jnp.float32(-1e30)),
            lambda lg: lg,
            logits)

    # Label logit: each label falls in exactly one vocab tile.  Single pass,
    # no one-hot temporary.  (Padded rows carry label -1 -> never matches.)
    labels = labels_ref[...]                                    # (Rt, 1) int32
    lbl_sc[...] += jnp.sum(jnp.where(col == labels, logits, 0.0),
                           axis=-1, keepdims=True)

    # Online (streaming) logsumexp across vocab tiles, all in f32.
    m_prev = m_sc[...]
    m_new = jnp.maximum(m_prev, jnp.max(logits, axis=-1, keepdims=True))
    l_sc[...] = (l_sc[...] * jnp.exp(m_prev - m_new)
                 + jnp.sum(jnp.exp(logits - m_new), axis=-1, keepdims=True))
    m_sc[...] = m_new

    @pl.when(v_idx == n_v - 1)
    def _finalize():
        per_row = m_sc[...] + jnp.log(l_sc[...]) - lbl_sc[...]  # (Rt, 1)
        # Lane-dense store (128 lanes, unmasked vst); lane 0 read by wrapper.
        out_ref[...] = jnp.broadcast_to(per_row, out_ref.shape)


def fused_lm_head_cross_entropy(h_bf16, w_bf16_padded, labels, vocab,
                                *, rt=768, vt=1024):
    """h_bf16: (R, D) bf16, w_bf16_padded: (D, Vpad) bf16 with Vpad % vt == 0,
    labels: (R,) int32, vocab: true vocabulary size (<= Vpad).
    Returns scalar f32 mean cross-entropy loss."""
    R, D = h_bf16.shape
    _, v_pad = w_bf16_padded.shape

    vt = min(vt, v_pad)
    assert v_pad % vt == 0, "weight must be pre-padded to a multiple of vt"

    # Row tile: multiple of 16 (bf16 sublane pack); multiples of 256 preferred
    # on v6e/v7x for full-width MXU passes at production sizes.
    rt = min(rt, _round_up(R, 16))
    r_pad = _round_up(R, rt)

    h_p = jnp.pad(h_bf16, ((0, r_pad - R), (0, 0)))
    labels_p = jnp.pad(labels.astype(jnp.int32).reshape(R, 1),
                       ((0, r_pad - R), (0, 0)), constant_values=-1)

    grid = (r_pad // rt, v_pad // vt)
    mask_last = v_pad != vocab
    kernel = functools.partial(_ce_lm_head_kernel, vocab=vocab, v_tile=vt,
                               mask_last=mask_last)

    # VMEM budget from the actual buffers (double-buffered bf16 inputs, f32
    # logits temporaries, lane-padded labels/out/scratch) + headroom.  The
    # scoped defaults (16 MiB v5e / 32 MiB v6e,v7x) would block the large
    # row tiles the roofline wants.
    need = (2 * rt * D * 2          # h, double-buffered bf16
            + 2 * D * vt * 2        # w, double-buffered bf16
            + 2 * rt * 128 * 4      # labels (lane-padded), double-buffered
            + 2 * rt * 128 * 4      # out, double-buffered
            + 3 * rt * 128 * 4      # m/l/lbl scratch (lane-padded)
            + 2 * rt * vt * 4)      # f32 logits + exp temporaries
    try:
        phys = int(pltpu.get_tpu_info().vmem_capacity_bytes)
    except Exception:               # pragma: no cover - conservative fallback
        phys = 128 << 20
    vmem_limit = int(min(max(need + need // 4 + (4 << 20), 32 << 20),
                         max(phys - (8 << 20), 32 << 20)))

    cost = pl.CostEstimate(
        flops=2 * r_pad * v_pad * D,
        transcendentals=r_pad * v_pad,
        bytes_accessed=((r_pad // rt) * D * v_pad * 2   # W re-streamed / row tile
                        + r_pad * D * 2                 # hidden rows
                        + r_pad * 128 * 4               # per-row loss out
                        + r_pad * 4))                   # labels

    per_row = pl.pallas_call(
        kernel,
        out_shape=jax.ShapeDtypeStruct((r_pad, 128), jnp.float32),
        grid_spec=pltpu.PrefetchScalarGridSpec(
            num_scalar_prefetch=0,
            grid=grid,
            in_specs=[
                pl.BlockSpec((rt, D), lambda r, v: (r, 0)),   # hidden rows
                pl.BlockSpec((D, vt), lambda r, v: (0, v)),   # weight slab
                pl.BlockSpec((rt, 1), lambda r, v: (r, 0)),   # labels
            ],
            out_specs=pl.BlockSpec((rt, 128), lambda r, v: (r, 0)),
            scratch_shapes=[pltpu.VMEM((rt, 1), jnp.float32)] * 3,
        ),
        compiler_params=pltpu.CompilerParams(
            dimension_semantics=("parallel", "arbitrary"),
            vmem_limit_bytes=vmem_limit),
        cost_estimate=cost,
    )(h_p, w_bf16_padded, labels_p)

    # Final reduction + mean in the wrapper; multiply by precomputed 1/R.
    return jnp.sum(per_row[:R, 0]) * (1.0 / R)


# ---------------------------------------------------------------------------
# One-time parameter preparation (outside the training step)
# ---------------------------------------------------------------------------
def prepare_lm_params(embed_table, lm_head_w, *, vt=1024):
    """Cast params to bf16 once and pre-pad the LM head vocab dim to a
    multiple of vt, so the forward never re-casts / re-pads per call."""
    V, _ = embed_table.shape
    vt = min(vt, _round_up(V, 128))
    v_pad = _round_up(V, vt)
    return {
        "embed_bf16": embed_table.astype(jnp.bfloat16),
        "w_bf16_padded": jnp.pad(lm_head_w.astype(jnp.bfloat16),
                                 ((0, 0), (0, v_pad - V))),
        "vocab": V,
        "vt": vt,
    }


# ---------------------------------------------------------------------------
# AutoregressiveWrapper.forward equivalent
# ---------------------------------------------------------------------------
def autoregressive_wrapper_forward(x, params, *, rt=768):
    """
    x:      (B, T) int32 token ids
    params: output of prepare_lm_params (bf16 embed table, pre-padded bf16 W)
    returns scalar mean cross-entropy loss (F.cross_entropy, 'mean' reduction).
    """
    x_inp = x[:, :-1]          # (B, T-1)
    x_labels = x[:, 1:]        # (B, T-1)
    B, N = x_inp.shape
    D = params["embed_bf16"].shape[1]

    # net(x_inp): bf16 embedding gather (JAX glue) + fused LM head + CE (kernel).
    # TODO(synk): fuse the embedding gather into the kernel via
    #   PrefetchScalarGridSpec scalar-prefetch of token ids + per-row-tile DMA
    #   gather, to remove the remaining R*D HBM round-trip of hidden states.
    h = jnp.take(params["embed_bf16"], x_inp.reshape(B * N), axis=0)  # (R, D) bf16
    labels = x_labels.reshape(B * N)
    return fused_lm_head_cross_entropy(h, params["w_bf16_padded"], labels,
                                       params["vocab"], rt=rt, vt=params["vt"])


# ---------------------------------------------------------------------------
# Pure-JAX reference for verification (same bf16-quantized params)
# ---------------------------------------------------------------------------
def reference_forward(x, embed_table, lm_head_w):
    x_inp, x_labels = x[:, :-1], x[:, 1:]
    et = embed_table.astype(jnp.bfloat16).astype(jnp.float32)
    w = lm_head_w.astype(jnp.bfloat16).astype(jnp.float32)
    h = jnp.take(et, x_inp, axis=0)                          # (B, N, D)
    logits = jnp.einsum("bnd,dv->bnv", h, w)                 # (B, N, V)
    logz = jax.nn.logsumexp(logits, axis=-1)                 # (B, N)
    label_logit = jnp.take_along_axis(
        logits, x_labels[..., None], axis=-1
    )[..., 0]                                                # (B, N)
    return jnp.mean(logz - label_logit)


if __name__ == "__main__":
    key = jax.random.PRNGKey(0)
    k_tok, k_emb, k_w = jax.random.split(key, 3)

    B, T = 3, 11         # batch, sequence length -> R = B*(T-1) = 30 rows
    D, V = 32, 500       # hidden dim, vocab (not a multiple of the vocab tile)

    x = jax.random.randint(k_tok, (B, T), 0, V, dtype=jnp.int32)
    embed_table = jax.random.normal(k_emb, (V, D), dtype=jnp.float32) * 0.02
    lm_head_w = jax.random.normal(k_w, (D, V), dtype=jnp.float32) * 0.02

    # One-time param prep (bf16 + vocab pre-pad), as in a real training loop.
    params = prepare_lm_params(embed_table, lm_head_w, vt=256)

    # Small tiles for the demo: rt=16 keeps the bf16 (16,128) sublane pack;
    # grid = (2 row tiles) x (2 vocab tiles) exercises the parallel row axis,
    # the streaming-vocab accumulators, row padding (30 -> 32), and the
    # last-tile vocab-padding mask (500 -> 512).
    loss = autoregressive_wrapper_forward(x, params, rt=16)
    loss = jax.block_until_ready(loss)

    ref = reference_forward(x, embed_table, lm_head_w)
    assert jnp.allclose(loss, ref, rtol=1e-3, atol=1e-3), (loss, ref)

    print("KERNEL_OK")
</pallas_src>

<mosaic_0001>
module attributes {stable_mosaic.version = 11 : i64} {
  func.func @_ce_lm_head_kernel(%arg0: i32, %arg1: i32, %arg2: memref<16x32xbf16, #tpu.memory_space<vmem>>, %arg3: memref<32x256xbf16, #tpu.memory_space<vmem>>, %arg4: memref<16x1xi32, #tpu.memory_space<vmem>>, %arg5: memref<16x128xf32, #tpu.memory_space<vmem>>, %arg6: memref<16x1xf32, #tpu.memory_space<vmem>>, %arg7: memref<16x1xf32, #tpu.memory_space<vmem>>, %arg8: memref<16x1xf32, #tpu.memory_space<vmem>>) attributes {dimension_semantics = [#tpu.dimension_semantics<parallel>, #tpu.dimension_semantics<arbitrary>], iteration_bounds = array<i64: 2, 2>, scalar_prefetch = 0 : i64, scratch_operands = 3 : i64, tpu.core_type = #tpu.core_type<tc>, window_params = [{transform_indices = @transform_0, window_bounds = array<i64: 16, 32>}, {transform_indices = @transform_1, window_bounds = array<i64: 32, 256>}, {transform_indices = @transform_2, window_bounds = array<i64: 16, 1>}, {transform_indices = @transform_3, window_bounds = array<i64: 16, 128>}]} {
    %c0_i32 = arith.constant 0 : i32
    %0 = arith.cmpi eq, %arg1, %c0_i32 : i32
    %1 = arith.extui %0 : i1 to i32
    %c0_i32_0 = arith.constant 0 : i32
    %2 = arith.cmpi ne, %1, %c0_i32_0 : i32
    scf.if %2 {
      %cst_25 = arith.constant 0xFF800000 : f32
      %43 = vector.broadcast %cst_25 : f32 to vector<16x1xf32>
      %c0_26 = arith.constant 0 : index
      %c0_27 = arith.constant 0 : index
      %44 = vector.load %arg6[%c0_26, %c0_27] : memref<16x1xf32, #tpu.memory_space<vmem>>, vector<16x1xf32>
      tpu.vector_store %arg6[%c0_26, %c0_27], %43 {strides = array<i32>} : memref<16x1xf32, #tpu.memory_space<vmem>>, vector<16x1xf32>,
      %cst_28 = arith.constant 0.000000e+00 : f32
      %45 = vector.broadcast %cst_28 : f32 to vector<16x1xf32>
      %c0_29 = arith.constant 0 : index
      %c0_30 = arith.constant 0 : index
      %46 = vector.load %arg7[%c0_29, %c0_30] : memref<16x1xf32, #tpu.memory_space<vmem>>, vector<16x1xf32>
      tpu.vector_store %arg7[%c0_29, %c0_30], %45 {strides = array<i32>} : memref<16x1xf32, #tpu.memory_space<vmem>>, vector<16x1xf32>,
      %cst_31 = arith.constant 0.000000e+00 : f32
      %47 = vector.broadcast %cst_31 : f32 to vector<16x1xf32>
      %c0_32 = arith.constant 0 : index
      %c0_33 = arith.constant 0 : index
      %48 = vector.load %arg8[%c0_32, %c0_33] : memref<16x1xf32, #tpu.memory_space<vmem>>, vector<16x1xf32>
      tpu.vector_store %arg8[%c0_32, %c0_33], %47 {strides = array<i32>} : memref<16x1xf32, #tpu.memory_space<vmem>>, vector<16x1xf32>,
    } else {
    }
    %c0 = arith.constant 0 : index
    %c0_1 = arith.constant 0 : index
    %3 = vector.load %arg2[%c0, %c0_1] : memref<16x32xbf16, #tpu.memory_space<vmem>>, vector<16x32xbf16>
    %c0_2 = arith.constant 0 : index
    %c0_3 = arith.constant 0 : index
    %4 = vector.load %arg3[%c0_2, %c0_3] : memref<32x256xbf16, #tpu.memory_space<vmem>>, vector<32x256xbf16>
    %cst = arith.constant dense<0.000000e+00> : vector<16x256xf32>
    %5 = tpu.matmul %3, %4, %cst {dimension_numbers = #tpu.dot_dimension_numbers<[1], [0], [0], [1], [0, 0, 1, 1], [], []>} : vector<16x32xbf16>, vector<32x256xbf16>, vector<16x256xf32> -> vector<16x256xf32>
    %6 = tpu.iota {dimensions = array<i32: 1>} : vector<16x256xi32>
    %c256_i32 = arith.constant 256 : i32
    %7 = arith.muli %arg1, %c256_i32 : i32
    %8 = vector.broadcast %7 : i32 to vector<16x256xi32>
    %9 = arith.addi %6, %8 : vector<16x256xi32>
    %c1_i32 = arith.constant 1 : i32
    %10 = arith.cmpi eq, %arg1, %c1_i32 : i32
    %11 = arith.extui %10 : i1 to i32
    %c0_i32_4 = arith.constant 0 : i32
    %12 = arith.cmpi ne, %11, %c0_i32_4 : i32
    %13 = scf.if %12 -> (vector<16x256xf32>) {
      %c500_i32 = arith.constant 500 : i32
      %43 = vector.broadcast %c500_i32 : i32 to vector<16x256xi32>
      %44 = arith.cmpi slt, %9, %43 : vector<16x256xi32>
      %cst_25 = arith.constant -1.000000e+30 : f32
      %45 = vector.broadcast %cst_25 : f32 to vector<16x256xf32>
      %46 = arith.select %44, %5, %45 : vector<16x256xi1>, vector<16x256xf32>
      scf.yield %46 : vector<16x256xf32>
    } else {
      scf.yield %5 : vector<16x256xf32>
    }
    %c0_5 = arith.constant 0 : index
    %c0_6 = arith.constant 0 : index
    %14 = vector.load %arg4[%c0_5, %c0_6] : memref<16x1xi32, #tpu.memory_space<vmem>>, vector<16x1xi32>
    %c0_7 = arith.constant 0 : index
    %c0_8 = arith.constant 0 : index
    %15 = vector.load %arg8[%c0_7, %c0_8] : memref<16x1xf32, #tpu.memory_space<vmem>>, vector<16x1xf32>
    %16 = vector.broadcast %14 : vector<16x1xi32> to vector<16x256xi32>
    %17 = arith.cmpi eq, %9, %16 : vector<16x256xi32>
    %cst_9 = arith.constant 0.000000e+00 : f32
    %18 = vector.broadcast %cst_9 : f32 to vector<16x256xf32>
    %19 = arith.select %17, %13, %18 : vector<16x256xi1>, vector<16x256xf32>
    %cst_10 = arith.constant dense<0.000000e+00> : vector<16xf32>
    %20 = vector.multi_reduction <add>, %19, %cst_10 [1] : vector<16x256xf32> to vector<16xf32>
    %21 = vector.shape_cast %20 : vector<16xf32> to vector<16x1xf32>
    %22 = arith.addf %15, %21 : vector<16x1xf32>
    %c0_11 = arith.constant 0 : index
    %c0_12 = arith.constant 0 : index
    %23 = vector.load %arg8[%c0_11, %c0_12] : memref<16x1xf32, #tpu.memory_space<vmem>>, vector<16x1xf32>
    tpu.vector_store %arg8[%c0_11, %c0_12], %22 {strides = array<i32>} : memref<16x1xf32, #tpu.memory_space<vmem>>, vector<16x1xf32>,
    %c0_13 = arith.constant 0 : index
    %c0_14 = arith.constant 0 : index
    %24 = vector.load %arg6[%c0_13, %c0_14] : memref<16x1xf32, #tpu.memory_space<vmem>>, vector<16x1xf32>
    %cst_15 = arith.constant dense<0xFF800000> : vector<16xf32>
    %25 = vector.multi_reduction <maximumf>, %13, %cst_15 [1] : vector<16x256xf32> to vector<16xf32>
    %26 = vector.shape_cast %25 : vector<16xf32> to vector<16x1xf32>
    %27 = arith.maximumf %24, %26 : vector<16x1xf32>
    %c0_16 = arith.constant 0 : index
    %c0_17 = arith.constant 0 : index
    %28 = vector.load %arg7[%c0_16, %c0_17] : memref<16x1xf32, #tpu.memory_space<vmem>>, vector<16x1xf32>
    %29 = arith.subf %24, %27 : vector<16x1xf32>
    %30 = math.exp %29 : vector<16x1xf32>
    %31 = arith.mulf %28, %30 : vector<16x1xf32>
    %32 = vector.broadcast %27 : vector<16x1xf32> to vector<16x256xf32>
    %33 = arith.subf %13, %32 : vector<16x256xf32>
    %34 = math.exp %33 : vector<16x256xf32>
    %cst_18 = arith.constant dense<0.000000e+00> : vector<16xf32>
    %35 = vector.multi_reduction <add>, %34, %cst_18 [1] : vector<16x256xf32> to vector<16xf32>
    %36 = vector.shape_cast %35 : vector<16xf32> to vector<16x1xf32>
    %37 = arith.addf %31, %36 : vector<16x1xf32>
    %c0_19 = arith.constant 0 : index
    %c0_20 = arith.constant 0 : index
    %38 = vector.load %arg7[%c0_19, %c0_20] : memref<16x1xf32, #tpu.memory_space<vmem>>, vector<16x1xf32>
    tpu.vector_store %arg7[%c0_19, %c0_20], %37 {strides = array<i32>} : memref<16x1xf32, #tpu.memory_space<vmem>>, vector<16x1xf32>,
    %c0_21 = arith.constant 0 : index
    %c0_22 = arith.constant 0 : index
    %39 = vector.load %arg6[%c0_21, %c0_22] : memref<16x1xf32, #tpu.memory_space<vmem>>, vector<16x1xf32>
    tpu.vector_store %arg6[%c0_21, %c0_22], %27 {strides = array<i32>} : memref<16x1xf32, #tpu.memory_space<vmem>>, vector<16x1xf32>,
    %c1_i32_23 = arith.constant 1 : i32
    %40 = arith.cmpi eq, %arg1, %c1_i32_23 : i32
    %41 = arith.extui %40 : i1 to i32
    %c0_i32_24 = arith.constant 0 : i32
    %42 = arith.cmpi ne, %41, %c0_i32_24 : i32
    scf.if %42 {
      %c0_25 = arith.constant 0 : index
      %c0_26 = arith.constant 0 : index
      %43 = vector.load %arg6[%c0_25, %c0_26] : memref<16x1xf32, #tpu.memory_space<vmem>>, vector<16x1xf32>
      %c0_27 = arith.constant 0 : index
      %c0_28 = arith.constant 0 : index
      %44 = vector.load %arg7[%c0_27, %c0_28] : memref<16x1xf32, #tpu.memory_space<vmem>>, vector<16x1xf32>
      %45 = math.log %44 : vector<16x1xf32>
      %46 = arith.addf %43, %45 : vector<16x1xf32>
      %c0_29 = arith.constant 0 : index
      %c0_30 = arith.constant 0 : index
      %47 = vector.load %arg8[%c0_29, %c0_30] : memref<16x1xf32, #tpu.memory_space<vmem>>, vector<16x1xf32>
      %48 = arith.subf %46, %47 : vector<16x1xf32>
      %49 = vector.shape_cast %48 : vector<16x1xf32> to vector<16x1xf32>
      %50 = vector.broadcast %49 : vector<16x1xf32> to vector<16x128xf32>
      %c0_31 = arith.constant 0 : index
      %c0_32 = arith.constant 0 : index
      %51 = vector.load %arg5[%c0_31, %c0_32] : memref<16x128xf32, #tpu.memory_space<vmem>>, vector<16x128xf32>
      tpu.vector_store %arg5[%c0_31, %c0_32], %50 {strides = array<i32>} : memref<16x128xf32, #tpu.memory_space<vmem>>, vector<16x128xf32>,
    } else {
    }
    return
  }
  func.func @transform_0(%arg0: i32, %arg1: i32) -> (i32, i32) {
    %c0_i32 = arith.constant 0 : i32
    %c0_i32_0 = arith.constant 0 : i32
    return %arg0, %c0_i32 : i32, i32
  }
  func.func @transform_1(%arg0: i32, %arg1: i32) -> (i32, i32) {
    %c0_i32 = arith.constant 0 : i32
    %c0_i32_0 = arith.constant 0 : i32
    return %c0_i32, %arg1 : i32, i32
  }
  func.func @transform_2(%arg0: i32, %arg1: i32) -> (i32, i32) {
    %c0_i32 = arith.constant 0 : i32
    %c0_i32_0 = arith.constant 0 : i32
    return %arg0, %c0_i32 : i32, i32
  }
  func.func @transform_3(%arg0: i32, %arg1: i32) -> (i32, i32) {
    %c0_i32 = arith.constant 0 : i32
    %c0_i32_0 = arith.constant 0 : i32
    return %arg0, %c0_i32 : i32, i32
  }
}

</mosaic_0001>

<llo_original>
// kernel: tpu_custom_call.1
$region0: #{tpu_custom_call.1}
  #allocation0 [shape = 'u32[]', space=smem, size = 0x4, offset = 0x4, fixed_abs, tag = 'smem constant byte address 0x4 - core index']
  #allocation1 [shape = 'u32[144,128]{1,0:T(1,128)}', space=vmem, size = 0x12000, scoped, tag = 'internal scratch']
  #allocation2 [shape = 'f32[16,1]{1,0:T(8,128)}', space=vmem, size = 0x2000, scoped, tag = 'scratch operand']
  #allocation3 [shape = 'f32[16,1]{1,0:T(8,128)}', space=vmem, size = 0x2000, scoped, tag = 'scratch operand']
  #allocation4 [shape = 'f32[16,1]{1,0:T(8,128)}', space=vmem, size = 0x2000, scoped, tag = 'scratch operand']
  %s0 = inlined_call_operand.vmem [shape: bf16[32,32], index: 0, kind: input, shape index: {}]
  %s1 = inlined_call_operand.hbm [shape: bf16[32,512], index: 1, kind: input, shape index: {}]
  %s2 = inlined_call_operand.vmem [shape: s32[32,1], index: 2, kind: input, shape index: {}]
  %s3 = inlined_call_operand.hbm [shape: f32[32,128], index: 3, kind: output, shape index: {}]
  %s4 = sld [smem:[#allocation0]]
  $region65: #{tpu_custom_call.1} parent=0
    _
  %s6 = ssub.s32 1, %s4
  %s7 = scalar_select 0, %s6, %s4
  $region1: #{tpu_custom_call.1} parent=0
    #allocation5 [shape = 'u8[32768]{0}', space=vmem, size = 0x8000, scoped, tag = 'input window, operand 1']
    #allocation6 [shape = 's32[2]{0}', space=sflag, size = 0x8, scoped, tag = 'scoped memory for tpu_custom_call.1']
    #allocation7 [shape = 's32[2]{0}', space=sflag, size = 0x8, scoped, tag = 'scoped memory for tpu_custom_call.1']
    #allocation8 [shape = 'u8[16384]{0}', space=vmem, size = 0x4000, scoped, tag = 'output window, operand 0']
    %8 = vsyncpa [#allocation6], 0
    %s9 = scalar_lea.sflag [#allocation6], 1
    %10 = vsyncpa %s9, 0
    %11 = vsyncpa [#allocation7], 0
    %s12 = scalar_lea.sflag [#allocation7], 1
    %13 = vsyncpa %s12, 0
    loop: start=0, step=1, limit=6
    $region2: #{tpu_custom_call.1} parent=1 // loop_pre_header
      _
    $region3: #{tpu_custom_call.1} parent=1 // loop_header
      %s15 = sphi 0, %s19
      %p16 = scmp.ge.s32.totalorder %s15, 6
      %s22 = sphi 0, %s34
      %s23 = sphi 0, %s30
      %s24 = sphi 0, %s22
      %s25 = sphi 0, %s23
      %s26 = sphi 0, %s24
      %s27 = sphi 0, %s25
      %s37 = sphi 0, %s39
      %s40 = sphi 0, %s37
      %s41 = sphi 0, %s40
      %s57 = sphi 0, %s41
      %s63 = sphi 0, %s65
      %s66 = sphi 0, %s63
      %s67 = sphi 0, %s66
      %s83 = sphi 0, %s67
      %s89 = sphi 0, %s91
      %s92 = sphi 0, %s89
      %s93 = sphi 0, %s92
      %s109 = sphi 0, %s93
      %s115 = sphi 0, %s117
      %s118 = sphi 0, %s115
      %s119 = sphi 0, %s118
      %s135 = sphi 0, %s119
    $region4: #{tpu_custom_call.1} parent=1 // loop_header_branch
      %18 = sbr.rel (%p16) target = $region8
    $region5: #{tpu_custom_call.1} parent=1 // loop_body
      %s20 = ssub.s32 %s15, 1
      %s21 = ssub.s32 %s15, 2
      %s28 = sadd.s32 1, %s23
      %p29 = scmp.ge.s32.totalorder %s28, 2
      %s30 = scalar_select %p29, 0, %s28
      %s31 = sadd.s32 1, %s22
      %s32 = scalar_select %p29, %s31, %s22
      %p33 = scmp.ge.s32.totalorder %s32, 2
      %s34 = scalar_select %p33, 0, %s32
      %s35 = ssub.s32 %s22, %s34
      %p36 = scmp.eq.s32.totalorder %s35, 0
      %s38 = sadd.s32 %s37, 1
      %s39 = scalar_select %p36, %s37, %s38
      %p42 = pneg %p36
      %p43 = scmp.eq.s32.totalorder %s15, 3
      %p44 = por %p42, %p43
      %p45 = scmp.ne.s32.totalorder %s37, %s40
      %p46 = scmp.eq.s32.totalorder %s15, 0
      %p47 = por %p45, %p46
      %p48 = scmp.ne.s32.totalorder %s37, %s40
      %p49 = scmp.eq.s32.totalorder %s20, 3
      %p50 = por %p48, %p49
      %p51 = scmp.ne.s32.totalorder %s40, %s41
      %p52 = scmp.eq.s32.totalorder %s20, 0
      %p53 = por %p51, %p52
      %p54 = scmp.ne.s32.totalorder %s40, %s41
      %p55 = scmp.eq.s32.totalorder %s21, 3
      %p56 = por %p54, %p55
      %p58 = scmp.ne.s32.totalorder %s41, %s57
      %p59 = scmp.eq.s32.totalorder %s21, 0
      %p60 = por %p58, %p59
      %s61 = ssub.s32 %s23, %s30
      %p62 = scmp.eq.s32.totalorder %s61, 0
      %s64 = sadd.s32 %s63, 1
      %s65 = scalar_select %p62, %s63, %s64
      %p68 = pneg %p62
      %p69 = scmp.eq.s32.totalorder %s15, 3
      %p70 = por %p68, %p69
      %p71 = scmp.ne.s32.totalorder %s63, %s66
      %p72 = scmp.eq.s32.totalorder %s15, 0
      %p73 = por %p71, %p72
      %p74 = scmp.ne.s32.totalorder %s63, %s66
      %p75 = scmp.eq.s32.totalorder %s20, 3
      %p76 = por %p74, %p75
      %p77 = scmp.ne.s32.totalorder %s66, %s67
      %p78 = scmp.eq.s32.totalorder %s20, 0
      %p79 = por %p77, %p78
      %p80 = scmp.ne.s32.totalorder %s66, %s67
      %p81 = scmp.eq.s32.totalorder %s21, 3
      %p82 = por %p80, %p81
      %p84 = scmp.ne.s32.totalorder %s67, %s83
      %p85 = scmp.eq.s32.totalorder %s21, 0
      %p86 = por %p84, %p85
      %s87 = ssub.s32 %s22, %s34
      %p88 = scmp.eq.s32.totalorder %s87, 0
      %s90 = sadd.s32 %s89, 1
      %s91 = scalar_select %p88, %s89, %s90
      %p94 = pneg %p88
      %p95 = scmp.eq.s32.totalorder %s15, 3
      %p96 = por %p94, %p95
      %p97 = scmp.ne.s32.totalorder %s89, %s92
      %p98 = scmp.eq.s32.totalorder %s15, 0
      %p99 = por %p97, %p98
      %p100 = scmp.ne.s32.totalorder %s89, %s92
      %p101 = scmp.eq.s32.totalorder %s20, 3
      %p102 = por %p100, %p101
      %p103 = scmp.ne.s32.totalorder %s92, %s93
      %p104 = scmp.eq.s32.totalorder %s20, 0
      %p105 = por %p103, %p104
      %p106 = scmp.ne.s32.totalorder %s92, %s93
      %p107 = scmp.eq.s32.totalorder %s21, 3
      %p108 = por %p106, %p107
      %p110 = scmp.ne.s32.totalorder %s93, %s109
      %p111 = scmp.eq.s32.totalorder %s21, 0
      %p112 = por %p110, %p111
      %s113 = ssub.s32 %s22, %s34
      %p114 = scmp.eq.s32.totalorder %s113, 0
      %s116 = sadd.s32 %s115, 1
      %s117 = scalar_select %p114, %s115, %s116
      %p120 = pneg %p114
      %p121 = scmp.eq.s32.totalorder %s15, 3
      %p122 = por %p120, %p121
      %p123 = scmp.ne.s32.totalorder %s115, %s118
      %p124 = scmp.eq.s32.totalorder %s15, 0
      %p125 = por %p123, %p124
      %p126 = scmp.ne.s32.totalorder %s115, %s118
      %p127 = scmp.eq.s32.totalorder %s20, 3
      %p128 = por %p126, %p127
      %p129 = scmp.ne.s32.totalorder %s118, %s119
      %p130 = scmp.eq.s32.totalorder %s20, 0
      %p131 = por %p129, %p130
      %p132 = scmp.ne.s32.totalorder %s118, %s119
      %p133 = scmp.eq.s32.totalorder %s21, 3
      %p134 = por %p132, %p133
      %p136 = scmp.ne.s32.totalorder %s119, %s135
      %p137 = scmp.eq.s32.totalorder %s21, 0
      %p138 = por %p136, %p137
      %p139 = scmp.le.s32.totalorder 1, %s15
      %p140 = scmp.lt.s32.totalorder %s15, 5
      %p141 = pnand %p139, %p140
      %p142 = pneg %p141
      // Predicated region
      $region9: #{tpu_custom_call.1} parent=5 // pred_check
        _
      $region10: #{tpu_custom_call.1} parent=5 // pred_check_branch
        %144 = sbr.rel (%p141) target = $region12
      $region11: #{tpu_custom_call.1} parent=5 // pred_region
        %s145 = ssub.s32 %s15, 1
      $region12: #{tpu_custom_call.1} parent=5 // pred_fallthru
        _
      %p146 = scmp.lt.s32.totalorder %s15, 4
      // Predicated region
      $region13: #{tpu_custom_call.1} parent=5 // pred_check
        %p147 = pneg %p146
      $region14: #{tpu_custom_call.1} parent=5 // pred_check_branch
        %149 = sbr.rel (%p147) target = $region16
      $region15: #{tpu_custom_call.1} parent=5 // pred_region
        // Predicated region
        $region17: #{tpu_custom_call.1} parent=15 // pred_check
          %p150 = pneg %p47
        $region18: #{tpu_custom_call.1} parent=15 // pred_check_branch
          %152 = sbr.rel (%p150) target = $region20
        $region19: #{tpu_custom_call.1} parent=15 // pred_region
          %s153 = smul.u32 2, %s22
          %p154 = scmp.lt.s32.totalorder %s153, 3
          %s155 = scalar_select %p154, %s153, 3
          %s156 = smul.addr %s155, 4
          %s157 = scalar_lea.vmem %s0, %s156
          %s158 = smul.u32 2, %s22
        $region20: #{tpu_custom_call.1} parent=15 // pred_fallthru
          _
        // Predicated region
        $region21: #{tpu_custom_call.1} parent=15 // pred_check
          %p159 = pneg %p73
        $region22: #{tpu_custom_call.1} parent=15 // pred_check_branch
          %161 = sbr.rel (%p159) target = $region24
        $region23: #{tpu_custom_call.1} parent=15 // pred_region
          %s162 = sand.u32 %s63, 1
          %s163 = scalar_lea.sflag [#allocation6], %s162
          %s164 = sand.u32 %s63, 1
          %s165 = smul.addr %s164, 32
          %s166 = scalar_lea.vmem [#allocation5], %s165
          %s167 = smul.u32 2, %s23
          %s169 = ssub.s32 512, 512
          %170 = vsyncadd %s163, %s169
          %s171 = smul.addr %s167, 64
          %s172 = scalar_lea.hbm %s1, %s171
          %s173 = sshll.u32 %s166, 4
          %s174 = int_to_ptr.vmem [resolvable:$true] %s173
          %179 = dma.hbm_to_vmem [thread:$0]  %s172, 512, %s174, %s163, 256, 128, 8
        $region24: #{tpu_custom_call.1} parent=15 // pred_fallthru
          _
        // Predicated region
        $region25: #{tpu_custom_call.1} parent=15 // pred_check
          %p180 = pneg %p99
        $region26: #{tpu_custom_call.1} parent=15 // pred_check_branch
          %182 = sbr.rel (%p180) target = $region28
        $region27: #{tpu_custom_call.1} parent=15 // pred_region
          %s183 = smul.u32 2, %s22
          %p184 = scmp.lt.s32.totalorder %s183, 3
          %s185 = scalar_select %p184, %s183, 3
          %s186 = smul.addr %s185, 8
          %s187 = scalar_lea.vmem %s2, %s186
          %s188 = smul.u32 2, %s22
        $region28: #{tpu_custom_call.1} parent=15 // pred_fallthru
          _
      $region16: #{tpu_custom_call.1} parent=5 // pred_fallthru
        _
      %p189 = scmp.le.s32.totalorder 1, %s15
      %p190 = scmp.lt.s32.totalorder %s15, 5
      %p191 = pnand %p189, %p190
      %p192 = pneg %p191
      // Predicated region
      $region29: #{tpu_custom_call.1} parent=5 // pred_check
        _
      $region30: #{tpu_custom_call.1} parent=5 // pred_check_branch
        %194 = sbr.rel (%p191) target = $region32
      $region31: #{tpu_custom_call.1} parent=5 // pred_region
        %s195 = ssub.s32 %s15, 1
        %s196 = sand.u32 %s66, 1
        %s197 = scalar_lea.sflag [#allocation6], %s196
        %s198 = sand.u32 %s66, 1
        %s199 = smul.addr %s198, 32
        %s200 = scalar_lea.vmem [#allocation5], %s199
        // Predicated region
        $region33: #{tpu_custom_call.1} parent=31 // pred_check
          %p201 = pneg %p79
        $region34: #{tpu_custom_call.1} parent=31 // pred_check_branch
          %203 = sbr.rel (%p201) target = $region36
        $region35: #{tpu_custom_call.1} parent=31 // pred_region
          %204 = dma.done %s197, 512
        $region36: #{tpu_custom_call.1} parent=31 // pred_fallthru
          _
        %s205 = smul.u32 2, %s24
        %p206 = scmp.lt.s32.totalorder %s205, 3
        %s207 = scalar_select %p206, %s205, 3
        %s208 = smul.addr %s207, 4
        %s209 = scalar_lea.vmem %s0, %s208
        %p210 = pneg %p53
        %p211 = pneg %p50
        %s212 = sand.u32 %s66, 1
        %s213 = scalar_lea.sflag [#allocation6], %s212
        %s214 = sand.u32 %s66, 1
        %s215 = smul.addr %s214, 32
        %s216 = scalar_lea.vmem [#allocation5], %s215
        %p217 = pneg %p79
        %p218 = pneg %p76
        %s219 = smul.u32 2, %s24
        %p220 = scmp.lt.s32.totalorder %s219, 3
        %s221 = scalar_select %p220, %s219, 3
        %s222 = smul.addr %s221, 8
        %s223 = scalar_lea.vmem %s2, %s222
        %p224 = pneg %p105
        %p225 = pneg %p102
        %p226 = pneg %p131
        %p227 = pneg %p128
        %s228 = sand.u32 %s118, 1
        %s229 = scalar_lea.sflag [#allocation7], %s228
        %s230 = sand.u32 %s118, 1
        %s231 = smul.addr %s230, 16
        %s232 = scalar_lea.vmem [#allocation8], %s231
        %s233 = smul.u32 2, %s24
        %p234 = scmp.lt.s32.totalorder %s233, 3
        %s235 = scalar_select %p234, %s233, 3
        %s236 = smul.addr %s235, 4
        %s237 = scalar_lea.vmem %s0, %s236
        %s238 = smul.u32 2, %s24
        %s239 = smul.u32 2, %s25
        %s240 = smul.u32 2, %s24
        %p241 = scmp.lt.s32.totalorder %s240, 3
        %s242 = scalar_select %p241, %s240, 3
        %s243 = smul.addr %s242, 8
        %s244 = scalar_lea.vmem %s2, %s243
        %s245 = smul.u32 2, %s24
        %s246 = smul.u32 2, %s24
        %p248 = scmp.eq.s32.totalorder %s25, 0
        // Predicated region
        $region37: #{tpu_custom_call.1} parent=31 // pred_check
          %p249 = pneg %p248
        $region38: #{tpu_custom_call.1} parent=31 // pred_check_branch
          %251 = sbr.rel (%p249) target = $region40
        $region39: #{tpu_custom_call.1} parent=31 // pred_region
          %vm252 = vcmask 7168
          %253 = vst.msk [vmem:[#allocation2] sm:$0xff] %vm252, -inf
          %254 = vst.msk [vmem:[#allocation2 + $0x8] sm:$0xff] %vm252, -inf
          %255 = vst.msk [vmem:[#allocation3] sm:$0xff] %vm252, 0.0
          %256 = vst.msk [vmem:[#allocation3 + $0x8] sm:$0xff] %vm252, 0.0
          %257 = vst.msk [vmem:[#allocation4] sm:$0xff] %vm252, 0.0
          %258 = vst.msk [vmem:[#allocation4 + $0x8] sm:$0xff] %vm252, 0.0
        $region40: #{tpu_custom_call.1} parent=31 // pred_fallthru
          _
        %v259 = vld [vmem:[%s237] sm:$0xf]
        %v260 = vld [vmem:[%s237 + $0x4] sm:$0xf]
        %v261 = vld [vmem:[%s200] sm:$0xff]
        %v262 = vld [vmem:[%s200 + $0x8] sm:$0xff]
        %v263 = vld [vmem:[%s200 + $0x10] sm:$0xff]
        %v264 = vld [vmem:[%s200 + $0x18] sm:$0xff]
        %v267 = vunpack.c.l.b16 %v259
        %v268 = vunpack.c.l.b16 %v260
        %v269 = vpack.c.b16 %v268, %v267
        %v274 = vunpack.c.l.b16 %v261
        %v275 = vunpack.c.h.b16 %v261
        %v276 = vunpack.c.l.b16 %v262
        %v277 = vunpack.c.h.b16 %v262
        %v278 = vunpack.c.l.b16 %v263
        %v279 = vunpack.c.h.b16 %v263
        %v280 = vunpack.c.l.b16 %v264
        %v281 = vunpack.c.h.b16 %v264
        %v282 = vpack.c.b16 %v276, %v274
        %v283 = vpack.c.b16 %v277, %v275
        %v284 = vpack.c.b16 %v280, %v278
        %v285 = vpack.c.b16 %v281, %v279
        %vm290 = vcmask 261120
        %v292 = vsel %vm290, %v269, 0
        %294 = vmatprep.subr.bf16.mxu0 0
        %295 = vmatpush1.bf16.msra.mxu0 0
        %296 = vmatprep.subr.bf16.mxu0 0
        %297 = vmatpush1.bf16.msra.mxu0 0
        %298 = vmatprep.subr.bf16.mxu0 0
        %299 = vmatpush1.bf16.msra.mxu0 0
        %300 = vmatprep.subr.bf16.mxu0 0
        %301 = vmatpush1.bf16.msra.mxu0 0
        %302 = vmatprep.subr.bf16.mxu0 0
        %303 = vmatpush1.bf16.msra.mxu0 0
        %304 = vmatprep.subr.bf16.mxu0 0
        %305 = vmatpush1.bf16.msra.mxu0 0
        %306 = vmatprep.subr.bf16.mxu0 %v285
        %307 = vmatpush1.bf16.msra.mxu0 %v284
        %308 = vmatprep.subr.bf16.mxu0 %v283
        %309 = vmatpush1.bf16.msra.mxu0 %v282
        %310 = vmatprep.subr.bf16.mxu0 0
        %311 = vmatpush2.bf16.msra.mxu0 0
        %312 = vmatprep.subr.bf16.mxu0 0
        %313 = vmatpush2.bf16.msra.mxu0 0
        %314 = vmatprep.subr.bf16.mxu0 0
        %315 = vmatpush2.bf16.msra.mxu0 0
        %316 = vmatprep.subr.bf16.mxu0 0
        %317 = vmatpush2.bf16.msra.mxu0 0
        %318 = vmatprep.subr.bf16.mxu0 0
        %319 = vmatpush2.bf16.msra.mxu0 0
        %320 = vmatprep.subr.bf16.mxu0 0
        %321 = vmatpush2.bf16.msra.mxu0 0
        %322 = vmatprep.subr.bf16.mxu0 0
        %323 = vmatpush2.bf16.msra.mxu0 0
        %324 = vmatprep.subr.bf16.mxu0 0
        %325 = vmatpush2.bf16.msra.mxu0 0
        %326 = vmatprep.mubr.bf16.mxu0 0
        %327 = vmatmul.mubr.bf16.gmra.mxu0 %v292
        %v328 = vpop.f32.mrf.mxu0
        %v329 = vadd.f32 0.0, %v328
        %v330 = vpop.f32.mrf.mxu0
        %v331 = vadd.f32 0.0, %v330
        %v332 = vpop.f32.mrf.mxu0
        %v333 = vadd.f32 0.0, %v332
        %v334 = vpop.f32.mrf.mxu0
        %v335 = vadd.f32 0.0, %v334
        %336 = vdwg.mxu0
        %v337 = vlaneseq
        %v338 = vand.u32 %v337, 127
        %v339 = vadd.s32 %v338, 128
        %s340 = smul.u32 %s25, 256
        %v341 = vstv %s340
        %v342 = vadd.s32 %v338, %v341
        %v343 = vadd.s32 %v339, %v341
        %p344 = scmp.eq.s32.totalorder %s25, 1
        // Predicated region
        $region41: #{tpu_custom_call.1} parent=31 // pred_check
          %p345 = pneg %p344
        $region42: #{tpu_custom_call.1} parent=31 // pred_check_branch
          %347 = sbr.rel (%p345) target = $region44
        $region43: #{tpu_custom_call.1} parent=31 // pred_region
          %vm348 = vcmp.lt.s32.totalorder %v342, 500
          %vm349 = vcmp.lt.s32.totalorder %v343, 500
          %v350 = vsel %vm348, %v329, -1e+30
          %v351 = vsel %vm349, %v331, -1e+30
          %v352 = vsel %vm348, %v333, -1e+30
          %v353 = vsel %vm349, %v335, -1e+30
        $region44: #{tpu_custom_call.1} parent=31 // pred_fallthru
          %v354 = vphi 0, %v350
          %v355 = vphi 0, %v351
          %v356 = vphi 0, %v352
          %v357 = vphi 0, %v353
        %p358 = pneg %p344
        // Predicated region
        $region45: #{tpu_custom_call.1} parent=31 // pred_check
          _
        $region46: #{tpu_custom_call.1} parent=31 // pred_check_branch
          %360 = sbr.rel (%p344) target = $region48
        $region47: #{tpu_custom_call.1} parent=31 // pred_region
          _
        $region48: #{tpu_custom_call.1} parent=31 // pred_fallthru
          %v361 = vphi %v354, %v329
          %v362 = vphi %v355, %v331
          %v363 = vphi %v356, %v333
          %v364 = vphi %v357, %v335
        %v365 = vld [vmem:[%s244] sm:$0xff]
        %v366 = vld [vmem:[%s244 + $0x8] sm:$0xff]
        %v367 = vld [vmem:[#allocation4] sm:$0xff]
        %v368 = vld [vmem:[#allocation4 + $0x8] sm:$0xff]
        %369 = vset.pattern.permute.xlu0 0
        %370 = vperm.xlu0 %369, %v365
        %v371 = vpop.permute.xlu0 %370
        %372 = vset.pattern.permute.xlu0 0
        %373 = vperm.xlu0 %372, %v366
        %v374 = vpop.permute.xlu0 %373
        %vm375 = vcmp.eq.s32.totalorder %v342, %v371
        %vm376 = vcmp.eq.s32.totalorder %v343, %v371
        %vm377 = vcmp.eq.s32.totalorder %v342, %v374
        %vm378 = vcmp.eq.s32.totalorder %v343, %v374
        %v379 = vsel %vm375, %v361, 0.0
        %v380 = vsel %vm376, %v362, 0.0
        %v381 = vsel %vm377, %v363, 0.0
        %v382 = vsel %vm378, %v364, 0.0
        %v383 = vadd.f32 %v379, %v380
        %384 = vadd.xlane.f32.xlu0 %v383
        %v385 = vpop.xlane.xlu0 %384
        %v386 = vadd.f32 %v381, %v382
        %387 = vadd.xlane.f32.xlu0 %v386
        %v388 = vpop.xlane.xlu0 %387
        %v389 = vadd.f32 %v367, %v385
        %v390 = vadd.f32 %v368, %v388
        %vm391 = vcmask 7168
        %392 = vst.msk [vmem:[#allocation4] sm:$0xff] %vm391, %v389
        %393 = vst.msk [vmem:[#allocation4 + $0x8] sm:$0xff] %vm391, %v390
        %v394 = vld [vmem:[#allocation2] sm:$0xff]
        %v395 = vld [vmem:[#allocation2 + $0x8] sm:$0xff]
        %v396 = vmax.f32 %v361, %v362
        %397 = vmax.xlane.f32.xlu0 %v396
        %v398 = vpop.xlane.xlu0 %397
        %v399 = vmax.f32 %v363, %v364
        %400 = vmax.xlane.f32.xlu0 %v399
        %v401 = vpop.xlane.xlu0 %400
        %v402 = vmax.f32 %v394, %v398
        %v403 = vmax.f32 %v395, %v401
        %v404 = vld [vmem:[#allocation3] sm:$0xff]
        %v405 = vld [vmem:[#allocation3 + $0x8] sm:$0xff]
        %v406 = vsub.f32 %v394, %v402
        %v407 = vsub.f32 %v395, %v403
        %v408 = vmul.f32 %v406, 1.442695
        %v409 = vpow.pop %v408
        %v410 = vmul.f32 %v407, 1.442695
        %v411 = vpow.pop %v410
        %v412 = vmul.f32 %v404, %v409
        %v413 = vmul.f32 %v405, %v411
        %415 = vset.pattern.permute.xlu0 0
        %416 = vperm.xlu0 %415, %v402
        %v417 = vpop.permute.xlu0 %416
        %420 = vset.pattern.permute.xlu0 0
        %421 = vperm.xlu0 %420, %v403
        %v422 = vpop.permute.xlu0 %421
        %v424 = vsub.f32 %v361, %v417
        %v425 = vsub.f32 %v362, %v417
        %v426 = vsub.f32 %v363, %v422
        %v427 = vsub.f32 %v364, %v422
        %v428 = vmul.f32 %v424, 1.442695
        %v429 = vpow.pop %v428
        %v430 = vmul.f32 %v425, 1.442695
        %v431 = vpow.pop %v430
        %v432 = vmul.f32 %v426, 1.442695
        %v433 = vpow.pop %v432
        %v434 = vmul.f32 %v427, 1.442695
        %v435 = vpow.pop %v434
        %v436 = vadd.f32 %v429, %v431
        %437 = vadd.xlane.f32.xlu0 %v436
        %v438 = vpop.xlane.xlu0 %437
        %v439 = vadd.f32 %v433, %v435
        %440 = vadd.xlane.f32.xlu0 %v439
        %v441 = vpop.xlane.xlu0 %440
        %v442 = vadd.f32 %v412, %v438
        %v443 = vadd.f32 %v413, %v441
        %444 = vst.msk [vmem:[#allocation3] sm:$0xff] %vm391, %v442
        %445 = vst.msk [vmem:[#allocation3 + $0x8] sm:$0xff] %vm391, %v443
        %446 = vst.msk [vmem:[#allocation2] sm:$0xff] %vm391, %v402
        %447 = vst.msk [vmem:[#allocation2 + $0x8] sm:$0xff] %vm391, %v403
        // Predicated region
        $region49: #{tpu_custom_call.1} parent=31 // pred_check
          %p448 = pneg %p344
        $region50: #{tpu_custom_call.1} parent=31 // pred_check_branch
          %450 = sbr.rel (%p448) target = $region52
        $region51: #{tpu_custom_call.1} parent=31 // pred_region
          %v451 = vld [vmem:[#allocation2] sm:$0xff]
          %v452 = vld [vmem:[#allocation2 + $0x8] sm:$0xff]
          %v453 = vld [vmem:[#allocation3] sm:$0xff]
          %v454 = vld [vmem:[#allocation3 + $0x8] sm:$0xff]
          %v455 = vlog2.pop %v453
          %v456 = vmul.f32 %v455, 0.6931472
          %v457 = vlog2.pop %v454
          %v458 = vmul.f32 %v457, 0.6931472
          %v459 = vadd.f32 %v451, %v456
          %v460 = vadd.f32 %v452, %v458
          %v461 = vld [vmem:[#allocation4] sm:$0xff]
          %v462 = vld [vmem:[#allocation4 + $0x8] sm:$0xff]
          %v463 = vsub.f32 %v459, %v461
          %v464 = vsub.f32 %v460, %v462
          %466 = vset.pattern.permute.xlu0 0
          %467 = vperm.xlu0 %466, %v463
          %v468 = vpop.permute.xlu0 %467
          %471 = vset.pattern.permute.xlu0 0
          %472 = vperm.xlu0 %471, %v464
          %v473 = vpop.permute.xlu0 %472
          %475 = vst [vmem:[%s232] sm:$0xff] %v468
          %476 = vst [vmem:[%s232 + $0x8] sm:$0xff] %v473
        $region52: #{tpu_custom_call.1} parent=31 // pred_fallthru
          _
        %s477 = sand.u32 %s118, 1
        %s478 = scalar_lea.sflag [#allocation7], %s477
        %s479 = sand.u32 %s118, 1
        %s480 = smul.addr %s479, 16
        %s481 = scalar_lea.vmem [#allocation8], %s480
        // Predicated region
        $region53: #{tpu_custom_call.1} parent=31 // pred_check
          %p482 = pneg %p128
        $region54: #{tpu_custom_call.1} parent=31 // pred_check_branch
          %484 = sbr.rel (%p482) target = $region56
        $region55: #{tpu_custom_call.1} parent=31 // pred_region
          %s485 = smul.u32 2, %s24
          %s487 = ssub.s32 256, 256
          %488 = vsyncadd %s478, %s487
          %s489 = smul.addr %s485, 128
          %s490 = scalar_lea.hbm %s3, %s489
          %s491 = sshll.u32 %s481, 4
          %s492 = int_to_ptr.vmem [resolvable:$true] %s491
          %497 = dma.vmem_to_hbm [thread:$0]  %s492, 256, %s490, %s478, 128, 128, 8
        $region56: #{tpu_custom_call.1} parent=31 // pred_fallthru
          _
      $region32: #{tpu_custom_call.1} parent=5 // pred_fallthru
        _
      %p498 = scmp.le.s32.totalorder 2, %s15
      // Predicated region
      $region57: #{tpu_custom_call.1} parent=5 // pred_check
        %p499 = pneg %p498
      $region58: #{tpu_custom_call.1} parent=5 // pred_check_branch
        %501 = sbr.rel (%p499) target = $region60
      $region59: #{tpu_custom_call.1} parent=5 // pred_region
        %s502 = ssub.s32 %s15, 2
        // Predicated region
        $region61: #{tpu_custom_call.1} parent=59 // pred_check
          %p503 = pneg %p134
        $region62: #{tpu_custom_call.1} parent=59 // pred_check_branch
          %505 = sbr.rel (%p503) target = $region64
        $region63: #{tpu_custom_call.1} parent=59 // pred_region
          %s506 = sand.u32 %s119, 1
          %s507 = scalar_lea.sflag [#allocation7], %s506
          %s508 = sand.u32 %s119, 1
          %s509 = smul.addr %s508, 16
          %s510 = scalar_lea.vmem [#allocation8], %s509
          %511 = dma.done %s507, 256
        $region64: #{tpu_custom_call.1} parent=59 // pred_fallthru
          _
      $region60: #{tpu_custom_call.1} parent=5 // pred_fallthru
        _
    $region6: #{tpu_custom_call.1} parent=1 // loop_footer
      %s19 = sadd.s32 1, %s15
    $region7: #{tpu_custom_call.1} parent=1 // loop_footer_branch
      %14 = sbr.rel target = $region3
    $region8: #{tpu_custom_call.1} parent=1 // loop_exit
      _
    %512 = vsyncpa [#allocation6], 1
    %s513 = scalar_lea.sflag [#allocation6], 1
    %514 = vsyncpa %s513, 1
    %515 = vsyncpa [#allocation7], 1
    %s516 = scalar_lea.sflag [#allocation7], 1
    %517 = vsyncpa %s516, 1

</llo_original>
